<compile_context>
chip_gen: v5e
topology: v5e:2x2
jax: 0.10.0
libtpu: 0.0.40
codegen_flags: <defaults>
</compile_context>

<pallas_src>
import functools

import jax
import jax.numpy as jnp
from jax import lax
from jax.experimental import pallas as pl
from jax.experimental.pallas import tpu as pltpu

N_LAYERS = 3        # n_hidden_layers = 2  ->  3 SpectralNormLinear layers
EPS = 1e-12         # torch.nn.functional.normalize default eps


# ----------------------------------------------------------------------------
# Per-generation defaults (lane packing width, max packed-row tile).
# ----------------------------------------------------------------------------
def _device_defaults():
    kind = ""
    try:
        kind = jax.devices()[0].device_kind.lower()
    except Exception:
        pass
    wide_mxu = any(t in kind for t in ("v6", "v7", "tpu7"))   # 2x256^2 MXU
    is_v5e = ("v5 lite" in kind) or ("v5e" in kind)
    lanes = 256 if wide_mxu else 128
    # VMEM budget per tile ~= 2*in + 2*out + ~2 f32 intermediates + weights.
    # 4096x256 f32 tiles -> ~24 MiB (fits 32 MiB default scoped VMEM on
    # v6e/v7x); keep 2048 rows on v5e (16 MiB default scoped VMEM).
    max_tile = 2048 if is_v5e else 4096
    return lanes, max_tile


# ----------------------------------------------------------------------------
# Hoisted (grid-invariant) spectral-norm power iteration — plain JAX, tiny.
# Identical code path is used by the reference so numerics match exactly.
# ----------------------------------------------------------------------------
def _normalize_rows(v):
    # torch.nn.functional.normalize(v, dim=1): v / max(||v||_2, eps)
    n = jnp.sqrt(jnp.sum(v * v, axis=-1, keepdims=True))
    return v / jnp.maximum(n, EPS)


def power_iteration_step(w, u):
    """One step of SpectralNormLinear._update_u; returns (u_new, w_eff)."""
    v = _normalize_rows(jnp.dot(u, w, precision=lax.Precision.HIGHEST))
    u_new = _normalize_rows(jnp.dot(v, w.T, precision=lax.Precision.HIGHEST))
    w_eff = w * u_new                      # (out,in) * (1,out): column scaling
    return u_new, w_eff


# ----------------------------------------------------------------------------
# Pallas kernel: per tile, 3 lane-dense MXU matmuls + 2 ReLUs, cast on store.
# ----------------------------------------------------------------------------
def mlp3_kernel(x_ref, w_ref, out_ref):
    cdt = w_ref.dtype                      # matmul input dtype (f32 default)
    h = x_ref[...].astype(cdt)
    h = jnp.dot(h, w_ref[0], preferred_element_type=jnp.float32)
    h = jnp.maximum(h, 0.0).astype(cdt)
    h = jnp.dot(h, w_ref[1], preferred_element_type=jnp.float32)
    h = jnp.maximum(h, 0.0).astype(cdt)
    h = jnp.dot(h, w_ref[2], preferred_element_type=jnp.float32)
    out_ref[...] = h.astype(out_ref.dtype)          # ToDTypeWrapper cast


# ----------------------------------------------------------------------------
# Wrapper: ToDTypeWrapper(SpectralMLP)(x). Returns (out, updated_u_list).
# ----------------------------------------------------------------------------
@functools.partial(
    jax.jit, static_argnames=("out_dtype", "lanes", "max_tile", "matmul_dtype"))
def spectral_mlp_forward(x, weights, us, *, out_dtype=jnp.float32,
                         lanes=None, max_tile=None, matmul_dtype=jnp.float32):
    N, D = x.shape
    assert len(weights) == N_LAYERS and len(us) == N_LAYERS

    if lanes is None or max_tile is None:
        dl, dm = _device_defaults()
        lanes = dl if lanes is None else lanes
        max_tile = dm if max_tile is None else max_tile
    assert lanes % D == 0, "feature dim must divide the lane packing width"
    pack = lanes // D

    # --- grid-invariant prologue (once per call, fused under jit) -----------
    w_bds, u_news = [], []
    eye = jnp.eye(pack, dtype=jnp.float32)
    for w, u in zip(weights, us):
        u_new, w_eff = power_iteration_step(w, u)
        u_news.append(u_new)
        # y = h @ w_eff^T, packed:  y_p = h_p @ kron(I_pack, w_eff^T)
        w_bds.append(jnp.kron(eye, w_eff.T.astype(jnp.float32)))
    w_stack = jnp.stack(w_bds).astype(matmul_dtype)      # (3, lanes, lanes)

    # --- pad batch so packed rows land on native sublane multiples ----------
    sub = 16 if jnp.dtype(out_dtype).itemsize < 4 else 8
    row_mult = pack * sub
    n_pad = ((N + row_mult - 1) // row_mult) * row_mult
    if n_pad != N:
        x = jnp.pad(x, ((0, n_pad - N), (0, 0)))
    np_rows = n_pad // pack
    x_p = x.reshape(np_rows, lanes)       # row-major repack (layout plumbing)

    # --- tiling: cdiv grid, no divisor search, no whole-array fallback ------
    tm = np_rows if np_rows <= max_tile else max_tile
    grid = (pl.cdiv(np_rows, tm),)

    out_p = pl.pallas_call(
        mlp3_kernel,
        out_shape=jax.ShapeDtypeStruct((np_rows, lanes), out_dtype),
        grid_spec=pltpu.PrefetchScalarGridSpec(
            num_scalar_prefetch=0,
            grid=grid,
            in_specs=[
                pl.BlockSpec((tm, lanes), lambda i: (i, 0)),
                pl.BlockSpec((N_LAYERS, lanes, lanes), lambda i: (0, 0, 0)),
            ],
            out_specs=pl.BlockSpec((tm, lanes), lambda i: (i, 0)),
        ),
        compiler_params=pltpu.CompilerParams(
            dimension_semantics=("parallel",)),   # rows shard across TCs (v7x)
    )(x_p, w_stack)

    out = out_p.reshape(n_pad, D)[:N]
    return out, u_news


# ----------------------------------------------------------------------------
# Pure-JAX reference (mirrors the PyTorch forward) for the correctness check.
# ----------------------------------------------------------------------------
def spectral_mlp_reference(x, weights, us):
    h = x.astype(jnp.float32)
    for li, (w, u) in enumerate(zip(weights, us)):
        _, w_eff = power_iteration_step(w, u)
        h = jnp.dot(h, w_eff.T, precision=lax.Precision.HIGHEST)
        if li < len(weights) - 1:
            h = jnp.maximum(h, 0.0)
    return h


def init_params(key, dim):
    """Deterministic init matching SpectralNormLinear.__init__/reset_parameters."""
    weights, us = [], []
    for _ in range(N_LAYERS):
        key, kw, ku = jax.random.split(key, 3)
        bound = (3.0 / dim) ** 0.5          # kaiming_uniform_(a=1), fan_in=dim
        weights.append(jax.random.uniform(kw, (dim, dim), jnp.float32,
                                          -bound, bound))
        us.append(jax.random.normal(ku, (1, dim), jnp.float32))
    return weights, us


if __name__ == "__main__":
    # config: n_neurons = 32, n_hidden_layers = 2, dim_in = dim_out = 32
    N, D = 64, 32
    key = jax.random.PRNGKey(0)
    key, kx = jax.random.split(key)
    x = jax.random.normal(kx, (N, D), jnp.float32)
    weights, us = init_params(key, D)

    ref = spectral_mlp_reference(x, weights, us)

    # float32 target dtype: check against the reference.
    out, u_news = spectral_mlp_forward(x, weights, us, out_dtype=jnp.float32)
    out = jax.block_until_ready(out)
    assert out.shape == (N, D) and out.dtype == jnp.float32
    assert jnp.allclose(out, ref, rtol=1e-4, atol=1e-4), "mismatch vs reference"
    assert len(u_news) == N_LAYERS and u_news[0].shape == (1, D)

    # ToDTypeWrapper with bfloat16 target dtype: cast happens in the kernel store.
    out_bf16, _ = spectral_mlp_forward(x, weights, us, out_dtype=jnp.bfloat16)
    out_bf16 = jax.block_until_ready(out_bf16)
    assert out_bf16.shape == (N, D) and out_bf16.dtype == jnp.bfloat16
    assert jnp.allclose(out_bf16.astype(jnp.float32), ref,
                        rtol=2e-2, atol=2e-2), "bf16 cast mismatch"

    print("KERNEL_OK")
</pallas_src>

<mosaic_0001>
module attributes {stable_mosaic.version = 11 : i64} {
  func.func @mlp3_kernel(%arg0: i32, %arg1: memref<16x128xf32, #tpu.memory_space<vmem>>, %arg2: memref<3x128x128xf32, #tpu.memory_space<vmem>>, %arg3: memref<16x128xf32, #tpu.memory_space<vmem>>) attributes {dimension_semantics = [#tpu.dimension_semantics<parallel>], iteration_bounds = array<i64: 1>, scalar_prefetch = 0 : i64, scratch_operands = 0 : i64, tpu.core_type = #tpu.core_type<tc>, window_params = [{transform_indices = @transform_0, window_bounds = array<i64: 16, 128>}, {pipeline_mode = #tpu.pipeline_mode<synchronous>, transform_indices = @transform_1, window_bounds = array<i64: 3, 128, 128>}, {transform_indices = @transform_2, window_bounds = array<i64: 16, 128>}]} {
    %c0 = arith.constant 0 : index
    %c0_0 = arith.constant 0 : index
    %0 = vector.load %arg1[%c0, %c0_0] : memref<16x128xf32, #tpu.memory_space<vmem>>, vector<16x128xf32>
    %c0_1 = arith.constant 0 : index
    %c0_2 = arith.constant 0 : index
    %c0_3 = arith.constant 0 : index
    %1 = vector.load %arg2[%c0_1, %c0_2, %c0_3] : memref<3x128x128xf32, #tpu.memory_space<vmem>>, vector<1x128x128xf32>
    %2 = vector.shape_cast %1 : vector<1x128x128xf32> to vector<128x128xf32>
    %cst = arith.constant dense<0.000000e+00> : vector<16x128xf32>
    %3 = tpu.matmul %0, %2, %cst {dimension_numbers = #tpu.dot_dimension_numbers<[1], [0], [0], [1], [0, 0, 1, 1], [], []>} : vector<16x128xf32>, vector<128x128xf32>, vector<16x128xf32> -> vector<16x128xf32>
    %cst_4 = arith.constant 0.000000e+00 : f32
    %4 = vector.broadcast %cst_4 : f32 to vector<16x128xf32>
    %5 = arith.maximumf %3, %4 : vector<16x128xf32>
    %c1 = arith.constant 1 : index
    %c0_5 = arith.constant 0 : index
    %c0_6 = arith.constant 0 : index
    %6 = vector.load %arg2[%c1, %c0_5, %c0_6] : memref<3x128x128xf32, #tpu.memory_space<vmem>>, vector<1x128x128xf32>
    %7 = vector.shape_cast %6 : vector<1x128x128xf32> to vector<128x128xf32>
    %cst_7 = arith.constant dense<0.000000e+00> : vector<16x128xf32>
    %8 = tpu.matmul %5, %7, %cst_7 {dimension_numbers = #tpu.dot_dimension_numbers<[1], [0], [0], [1], [0, 0, 1, 1], [], []>} : vector<16x128xf32>, vector<128x128xf32>, vector<16x128xf32> -> vector<16x128xf32>
    %cst_8 = arith.constant 0.000000e+00 : f32
    %9 = vector.broadcast %cst_8 : f32 to vector<16x128xf32>
    %10 = arith.maximumf %8, %9 : vector<16x128xf32>
    %c2 = arith.constant 2 : index
    %c0_9 = arith.constant 0 : index
    %c0_10 = arith.constant 0 : index
    %11 = vector.load %arg2[%c2, %c0_9, %c0_10] : memref<3x128x128xf32, #tpu.memory_space<vmem>>, vector<1x128x128xf32>
    %12 = vector.shape_cast %11 : vector<1x128x128xf32> to vector<128x128xf32>
    %cst_11 = arith.constant dense<0.000000e+00> : vector<16x128xf32>
    %13 = tpu.matmul %10, %12, %cst_11 {dimension_numbers = #tpu.dot_dimension_numbers<[1], [0], [0], [1], [0, 0, 1, 1], [], []>} : vector<16x128xf32>, vector<128x128xf32>, vector<16x128xf32> -> vector<16x128xf32>
    %c0_12 = arith.constant 0 : index
    %c0_13 = arith.constant 0 : index
    %14 = vector.load %arg3[%c0_12, %c0_13] : memref<16x128xf32, #tpu.memory_space<vmem>>, vector<16x128xf32>
    tpu.vector_store %arg3[%c0_12, %c0_13], %13 {strides = array<i32>} : memref<16x128xf32, #tpu.memory_space<vmem>>, vector<16x128xf32>,
    return
  }
  func.func @transform_0(%arg0: i32) -> (i32, i32) {
    %c0_i32 = arith.constant 0 : i32
    %c0_i32_0 = arith.constant 0 : i32
    return %arg0, %c0_i32 : i32, i32
  }
  func.func @transform_1(%arg0: i32) -> (i32, i32, i32) {
    %c0_i32 = arith.constant 0 : i32
    %c0_i32_0 = arith.constant 0 : i32
    %c0_i32_1 = arith.constant 0 : i32
    %c0_i32_2 = arith.constant 0 : i32
    return %c0_i32, %c0_i32_0, %c0_i32_1 : i32, i32, i32
  }
  func.func @transform_2(%arg0: i32) -> (i32, i32) {
    %c0_i32 = arith.constant 0 : i32
    %c0_i32_0 = arith.constant 0 : i32
    return %arg0, %c0_i32 : i32, i32
  }
}

</mosaic_0001>

<llo_original>
// kernel: spectral_mlp_forward.1
$region0: #{spectral_mlp_forward.1}
  #allocation0 [shape = 'u32[]', space=smem, size = 0x4, offset = 0x4, fixed_abs, tag = 'smem constant byte address 0x4 - core index']
  #allocation1 [shape = 'u32[72,128]{1,0:T(1,128)}', space=vmem, size = 0x9000, scoped, tag = 'internal scratch']
  %s0 = inlined_call_operand.vmem [shape: f32[16,128], index: 0, kind: input, shape index: {}]
  %s1 = inlined_call_operand.vmem [shape: f32[3,128,128], index: 1, kind: input, shape index: {}]
  %s2 = inlined_call_operand.vmem [shape: f32[16,128], index: 2, kind: output, shape index: {}]
  %s3 = sld [smem:[#allocation0]]
  $region18: #{spectral_mlp_forward.1} parent=0
    _
  %s5 = ssub.s32 1, %s3
  %s6 = scalar_select 0, %s5, %s3
  // Predicated region
  $region2: #{spectral_mlp_forward.1} parent=0 // pred_check
    _
  $region3: #{spectral_mlp_forward.1} parent=0 // pred_check_branch
    %8 = sbr.rel (0) target = $region5
  $region4: #{spectral_mlp_forward.1} parent=0 // pred_region
    _
  $region5: #{spectral_mlp_forward.1} parent=0 // pred_fallthru
    _
  // Predicated region
  $region6: #{spectral_mlp_forward.1} parent=0 // pred_check
    _
  $region7: #{spectral_mlp_forward.1} parent=0 // pred_check_branch
    %10 = sbr.rel (0) target = $region9
  $region8: #{spectral_mlp_forward.1} parent=0 // pred_region
    _
  $region9: #{spectral_mlp_forward.1} parent=0 // pred_fallthru
    _
  %v11 = vld [vmem:[%s0] sm:$0xff]
  %v12 = vld [vmem:[%s0 + $0x8] sm:$0xff]
  %v13 = vld [vmem:[%s1] sm:$0xff]
  %v14 = vld [vmem:[%s1 + $0x8] sm:$0xff]
  %v15 = vld [vmem:[%s1 + $0x10] sm:$0xff]
  %v16 = vld [vmem:[%s1 + $0x18] sm:$0xff]
  %v17 = vld [vmem:[%s1 + $0x20] sm:$0xff]
  %v18 = vld [vmem:[%s1 + $0x28] sm:$0xff]
  %v19 = vld [vmem:[%s1 + $0x30] sm:$0xff]
  %v20 = vld [vmem:[%s1 + $0x38] sm:$0xff]
  %v21 = vld [vmem:[%s1 + $0x40] sm:$0xff]
  %v22 = vld [vmem:[%s1 + $0x48] sm:$0xff]
  %v23 = vld [vmem:[%s1 + $0x50] sm:$0xff]
  %v24 = vld [vmem:[%s1 + $0x58] sm:$0xff]
  %v25 = vld [vmem:[%s1 + $0x60] sm:$0xff]
  %v26 = vld [vmem:[%s1 + $0x68] sm:$0xff]
  %v27 = vld [vmem:[%s1 + $0x70] sm:$0xff]
  %v28 = vld [vmem:[%s1 + $0x78] sm:$0xff]
  %29 = vmatpush.msra.mxu0 %v28
  %30 = vmatpush.msra.mxu0 %v27
  %31 = vmatpush.msra.mxu0 %v26
  %32 = vmatpush.msra.mxu0 %v25
  %33 = vmatpush.msra.mxu0 %v24
  %34 = vmatpush.msra.mxu0 %v23
  %35 = vmatpush.msra.mxu0 %v22
  %36 = vmatpush.msra.mxu0 %v21
  %37 = vmatpush.msra.mxu0 %v20
  %38 = vmatpush.msra.mxu0 %v19
  %39 = vmatpush.msra.mxu0 %v18
  %40 = vmatpush.msra.mxu0 %v17
  %41 = vmatpush.msra.mxu0 %v16
  %42 = vmatpush.msra.mxu0 %v15
  %43 = vmatpush.msra.mxu0 %v14
  %44 = vmatpush.msra.mxu0 %v13
  %45 = vmatmul.f32.gmra.mxu0 %v11
  %v46 = vpop.f32.mrf.mxu0
  %v47 = vadd.f32 0.0, %v46
  %48 = vmatmul.f32.gmra.mxu0 %v12
  %v49 = vpop.f32.mrf.mxu0
  %v50 = vadd.f32 0.0, %v49
  %51 = vdwg.mxu0
  %v52 = vmax.f32 %v47, 0.0
  %v53 = vmax.f32 %v50, 0.0
  %s54 = scalar_lea.vmem %s1, 128
  %v55 = vld [vmem:[%s54] sm:$0xff]
  %v56 = vld [vmem:[%s54 + $0x8] sm:$0xff]
  %v57 = vld [vmem:[%s54 + $0x10] sm:$0xff]
  %v58 = vld [vmem:[%s54 + $0x18] sm:$0xff]
  %v59 = vld [vmem:[%s54 + $0x20] sm:$0xff]
  %v60 = vld [vmem:[%s54 + $0x28] sm:$0xff]
  %v61 = vld [vmem:[%s54 + $0x30] sm:$0xff]
  %v62 = vld [vmem:[%s54 + $0x38] sm:$0xff]
  %v63 = vld [vmem:[%s54 + $0x40] sm:$0xff]
  %v64 = vld [vmem:[%s54 + $0x48] sm:$0xff]
  %v65 = vld [vmem:[%s54 + $0x50] sm:$0xff]
  %v66 = vld [vmem:[%s54 + $0x58] sm:$0xff]
  %v67 = vld [vmem:[%s54 + $0x60] sm:$0xff]
  %v68 = vld [vmem:[%s54 + $0x68] sm:$0xff]
  %v69 = vld [vmem:[%s54 + $0x70] sm:$0xff]
  %v70 = vld [vmem:[%s54 + $0x78] sm:$0xff]
  %71 = vmatpush.msra.mxu0 %v70
  %72 = vmatpush.msra.mxu0 %v69
  %73 = vmatpush.msra.mxu0 %v68
  %74 = vmatpush.msra.mxu0 %v67
  %75 = vmatpush.msra.mxu0 %v66
  %76 = vmatpush.msra.mxu0 %v65
  %77 = vmatpush.msra.mxu0 %v64
  %78 = vmatpush.msra.mxu0 %v63
  %79 = vmatpush.msra.mxu0 %v62
  %80 = vmatpush.msra.mxu0 %v61
  %81 = vmatpush.msra.mxu0 %v60
  %82 = vmatpush.msra.mxu0 %v59
  %83 = vmatpush.msra.mxu0 %v58
  %84 = vmatpush.msra.mxu0 %v57
  %85 = vmatpush.msra.mxu0 %v56
  %86 = vmatpush.msra.mxu0 %v55
  %87 = vmatmul.f32.gmra.mxu0 %v52
  %v88 = vpop.f32.mrf.mxu0
  %v89 = vadd.f32 0.0, %v88
  %90 = vmatmul.f32.gmra.mxu0 %v53
  %v91 = vpop.f32.mrf.mxu0
  %v92 = vadd.f32 0.0, %v91
  %93 = vdwg.mxu0
  %v94 = vmax.f32 %v89, 0.0
  %v95 = vmax.f32 %v92, 0.0
  %s96 = scalar_lea.vmem %s1, 256
  %v97 = vld [vmem:[%s96] sm:$0xff]
  %v98 = vld [vmem:[%s96 + $0x8] sm:$0xff]
  %v99 = vld [vmem:[%s96 + $0x10] sm:$0xff]
  %v100 = vld [vmem:[%s96 + $0x18] sm:$0xff]
  %v101 = vld [vmem:[%s96 + $0x20] sm:$0xff]
  %v102 = vld [vmem:[%s96 + $0x28] sm:$0xff]
  %v103 = vld [vmem:[%s96 + $0x30] sm:$0xff]
  %v104 = vld [vmem:[%s96 + $0x38] sm:$0xff]
  %v105 = vld [vmem:[%s96 + $0x40] sm:$0xff]
  %v106 = vld [vmem:[%s96 + $0x48] sm:$0xff]
  %v107 = vld [vmem:[%s96 + $0x50] sm:$0xff]
  %v108 = vld [vmem:[%s96 + $0x58] sm:$0xff]
  %v109 = vld [vmem:[%s96 + $0x60] sm:$0xff]
  %v110 = vld [vmem:[%s96 + $0x68] sm:$0xff]
  %v111 = vld [vmem:[%s96 + $0x70] sm:$0xff]
  %v112 = vld [vmem:[%s96 + $0x78] sm:$0xff]
  %113 = vmatpush.msra.mxu0 %v112
  %114 = vmatpush.msra.mxu0 %v111
  %115 = vmatpush.msra.mxu0 %v110
  %116 = vmatpush.msra.mxu0 %v109
  %117 = vmatpush.msra.mxu0 %v108
  %118 = vmatpush.msra.mxu0 %v107
  %119 = vmatpush.msra.mxu0 %v106
  %120 = vmatpush.msra.mxu0 %v105
  %121 = vmatpush.msra.mxu0 %v104
  %122 = vmatpush.msra.mxu0 %v103
  %123 = vmatpush.msra.mxu0 %v102
  %124 = vmatpush.msra.mxu0 %v101
  %125 = vmatpush.msra.mxu0 %v100
  %126 = vmatpush.msra.mxu0 %v99
  %127 = vmatpush.msra.mxu0 %v98
  %128 = vmatpush.msra.mxu0 %v97
  %129 = vmatmul.f32.gmra.mxu0 %v94
  %v130 = vpop.f32.mrf.mxu0
  %v131 = vadd.f32 0.0, %v130
  %132 = vmatmul.f32.gmra.mxu0 %v95
  %v133 = vpop.f32.mrf.mxu0
  %v134 = vadd.f32 0.0, %v133
  %135 = vdwg.mxu0
  %136 = vst [vmem:[%s2] sm:$0xff] %v131
  %137 = vst [vmem:[%s2 + $0x8] sm:$0xff] %v134
  // Predicated region
  $region10: #{spectral_mlp_forward.1} parent=0 // pred_check
    _
  $region11: #{spectral_mlp_forward.1} parent=0 // pred_check_branch
    %139 = sbr.rel (0) target = $region13
  $region12: #{spectral_mlp_forward.1} parent=0 // pred_region
    _
  $region13: #{spectral_mlp_forward.1} parent=0 // pred_fallthru
    _
  // Predicated region
  $region14: #{spectral_mlp_forward.1} parent=0 // pred_check
    _
  $region15: #{spectral_mlp_forward.1} parent=0 // pred_check_branch
    %141 = sbr.rel (0) target = $region17
  $region16: #{spectral_mlp_forward.1} parent=0 // pred_region
    _
  $region17: #{spectral_mlp_forward.1} parent=0 // pred_fallthru
    _

</llo_original>
